<compile_context>
chip_gen: v7x
topology: tpu7x:2x2x1
jax: 0.10.0
libtpu: 0.0.40
codegen_flags: <defaults>
</compile_context>

<pallas_src>
import functools

import jax
import jax.numpy as jnp
import numpy as np
from jax.experimental import pallas as pl
from jax.experimental.pallas import tpu as pltpu


def _round_up(x, m):
    return ((x + m - 1) // m) * m


def _gce_kernel(logits_ref, targets_ref, out_ref, *, q, n_valid, row_tile):
    """One row tile: stable-LSE GCE, masked ragged tail, partial sum to SMEM."""
    x = logits_ref[...].astype(jnp.float32)          # (TN, C) f32
    t = targets_ref[...]                             # (TN, 1) int32

    # Row-wise log-sum-exp (numerically stable).
    m = jnp.max(x, axis=1, keepdims=True)            # (TN, 1)
    lse = m + jnp.log(jnp.sum(jnp.exp(x - m), axis=1, keepdims=True))

    # Gather the target-class logit: (1, C) iota broadcast against (TN, 1)
    # targets -> exact one-hot compare + select + lane reduce.
    col_ids = jax.lax.broadcasted_iota(jnp.int32, (1, x.shape[1]), 1)
    x_t = jnp.sum(jnp.where(col_ids == t, x, 0.0), axis=1, keepdims=True)

    # GCE per-row loss: (1 - p^q) / q with p^q = exp(q * (x_t - lse)).
    loss = (1.0 - jnp.exp(q * (x_t - lse))) / q       # (TN, 1)

    # Mask ragged-tail rows: OOB block reads are undefined (possibly NaN/Inf);
    # the select discards them before they can reach the reduced output.
    row0 = pl.program_id(0) * row_tile
    rows = row0 + jax.lax.broadcasted_iota(jnp.int32, loss.shape, 0)
    masked = jnp.where(rows < n_valid, loss, 0.0)

    # Single per-block partial sum (scalar) into the SMEM-spaced output block.
    out_ref[0, 0] = jnp.sum(masked)


def _vmem_limit_bytes():
    """~75% of physical VMEM (48 MiB on v7x, 96 MiB on v5e/v6e), clamped."""
    cap = None
    try:
        cap = getattr(pltpu.get_tpu_info(), "vmem_capacity_bytes", None)
    except Exception:
        cap = None
    if not cap:
        cap = 64 << 20  # conservative default = v7x per-core VMEM
    return max(16 << 20, min(int(0.75 * cap), 100 << 20))


def _pick_row_tile(n, c, itemsize, vmem_limit):
    sublane = 16 if itemsize == 2 else 8
    # Live VMEM per row of tile: double-buffered logits row, ~4 f32 (TN, C)
    # intermediates (x copy, exp, select result, temps), and the lane-padded
    # (TN, 1) int32 targets block (x2 buffers, padded to 128 lanes).
    per_row_bytes = c * (2 * itemsize + 4 * 4) + 2 * 128 * 4
    budget = int(0.55 * vmem_limit)  # leave ~45% headroom for the compiler
    row_tile = budget // per_row_bytes
    # Keep the logits DMA block itself in the multi-MiB sweet spot (cap 16 MiB).
    row_tile = min(row_tile, max(sublane, (16 << 20) // max(1, c * itemsize)))
    # Never bigger than the (sublane-rounded) batch.
    row_tile = min(row_tile, _round_up(n, sublane))
    row_tile = max(sublane, (row_tile // sublane) * sublane)
    return row_tile


def generalized_cross_entropy(logits, targets, q=0.7, row_tile=None):
    """logits: (N, C) float; targets: (N,) int. Returns scalar f32 loss."""
    assert 0.0 < q <= 1.0, "q must be in (0, 1]"
    n, c = logits.shape
    itemsize = jnp.dtype(logits.dtype).itemsize
    sublane = 16 if itemsize == 2 else 8

    vmem_limit = _vmem_limit_bytes()
    if row_tile is None:
        row_tile = _pick_row_tile(n, c, itemsize, vmem_limit)
    else:
        row_tile = max(sublane, (row_tile // sublane) * sublane)
        row_tile = min(row_tile, _round_up(n, sublane))

    # Ragged grid: no padding of the (large) logits tensor; the kernel masks
    # the tail rows.  Only the tiny targets array is reshaped (no copy of
    # logits outside the kernel).
    num_blocks = (n + row_tile - 1) // row_tile
    targets2d = targets.astype(jnp.int32).reshape(n, 1)

    kernel = functools.partial(
        _gce_kernel, q=float(q), n_valid=n, row_tile=row_tile
    )

    partial_sums = pl.pallas_call(
        kernel,
        out_shape=jax.ShapeDtypeStruct((num_blocks, 1), jnp.float32),
        grid_spec=pltpu.PrefetchScalarGridSpec(
            num_scalar_prefetch=0,
            grid=(num_blocks,),
            in_specs=[
                pl.BlockSpec((row_tile, c), lambda i: (i, 0)),
                pl.BlockSpec((row_tile, 1), lambda i: (i, 0)),
            ],
            # One scalar partial sum per grid step, SMEM-spaced (no lane-sparse
            # masked vector stores, no (N, 1) HBM writeback).
            out_specs=pl.BlockSpec(
                (1, 1), lambda i: (i, 0), memory_space=pltpu.MemorySpace.SMEM
            ),
        ),
        compiler_params=pltpu.CompilerParams(
            dimension_semantics=("parallel",),
            vmem_limit_bytes=vmem_limit,
        ),
    )(logits, targets2d)

    # Tiny (num_blocks,) reduction + exact mean over the true batch size.
    return jnp.sum(partial_sums) / jnp.float32(n)


def _reference(logits, targets, q=0.7):
    probs = jax.nn.softmax(logits.astype(jnp.float32), axis=1)
    tp = probs[jnp.arange(targets.shape[0]), targets]
    return jnp.mean((1.0 - tp**q) / q)


if __name__ == "__main__":
    key = jax.random.PRNGKey(0)
    k_logits, k_targets = jax.random.split(key)

    N, C = 8, 16  # batch of 8 samples, 16 classes
    logits = jax.random.normal(k_logits, (N, C), dtype=jnp.float32)
    targets = jax.random.randint(k_targets, (N,), 0, C, dtype=jnp.int32)

    loss = generalized_cross_entropy(logits, targets, q=0.7)
    loss = jax.block_until_ready(loss)

    ref = jax.block_until_ready(_reference(logits, targets, q=0.7))
    assert np.allclose(np.asarray(loss), np.asarray(ref), rtol=1e-5, atol=1e-5), (
        loss,
        ref,
    )
    print("KERNEL_OK")
</pallas_src>

<mosaic_0001>
module attributes {stable_mosaic.version = 11 : i64} {
  func.func @_gce_kernel(%arg0: i32, %arg1: memref<8x16xf32, #tpu.memory_space<vmem>>, %arg2: memref<8x1xi32, #tpu.memory_space<vmem>>, %arg3: memref<1x1xf32, #tpu.memory_space<smem>>) attributes {dimension_semantics = [#tpu.dimension_semantics<parallel>], iteration_bounds = array<i64: 1>, scalar_prefetch = 0 : i64, scratch_operands = 0 : i64, tpu.core_type = #tpu.core_type<tc>, window_params = [{transform_indices = @transform_0, window_bounds = array<i64: 8, 16>}, {transform_indices = @transform_1, window_bounds = array<i64: 8, 1>}, {transform_indices = @transform_2, window_bounds = array<i64: 1, 1>}]} {
    %c0 = arith.constant 0 : index
    %c0_0 = arith.constant 0 : index
    %0 = vector.load %arg1[%c0, %c0_0] : memref<8x16xf32, #tpu.memory_space<vmem>>, vector<8x16xf32>
    %c0_1 = arith.constant 0 : index
    %c0_2 = arith.constant 0 : index
    %1 = vector.load %arg2[%c0_1, %c0_2] : memref<8x1xi32, #tpu.memory_space<vmem>>, vector<8x1xi32>
    %cst = arith.constant dense<0xFF800000> : vector<8xf32>
    %2 = vector.multi_reduction <maximumf>, %0, %cst [1] : vector<8x16xf32> to vector<8xf32>
    %3 = vector.shape_cast %2 : vector<8xf32> to vector<8x1xf32>
    %4 = vector.broadcast %3 : vector<8x1xf32> to vector<8x16xf32>
    %5 = arith.subf %0, %4 : vector<8x16xf32>
    %6 = math.exp %5 : vector<8x16xf32>
    %cst_3 = arith.constant dense<0.000000e+00> : vector<8xf32>
    %7 = vector.multi_reduction <add>, %6, %cst_3 [1] : vector<8x16xf32> to vector<8xf32>
    %8 = vector.shape_cast %7 : vector<8xf32> to vector<8x1xf32>
    %9 = math.log %8 : vector<8x1xf32>
    %10 = arith.addf %3, %9 : vector<8x1xf32>
    %11 = tpu.iota {dimensions = array<i32: 1>} : vector<1x16xi32>
    %12 = vector.broadcast %11 : vector<1x16xi32> to vector<8x16xi32>
    %13 = vector.broadcast %1 : vector<8x1xi32> to vector<8x16xi32>
    %14 = arith.cmpi eq, %12, %13 : vector<8x16xi32>
    %cst_4 = arith.constant 0.000000e+00 : f32
    %15 = vector.broadcast %cst_4 : f32 to vector<8x16xf32>
    %16 = arith.select %14, %0, %15 : vector<8x16xi1>, vector<8x16xf32>
    %cst_5 = arith.constant dense<0.000000e+00> : vector<8xf32>
    %17 = vector.multi_reduction <add>, %16, %cst_5 [1] : vector<8x16xf32> to vector<8xf32>
    %18 = vector.shape_cast %17 : vector<8xf32> to vector<8x1xf32>
    %19 = arith.subf %18, %10 : vector<8x1xf32>
    %cst_6 = arith.constant 0.699999988 : f32
    %20 = vector.broadcast %cst_6 : f32 to vector<8x1xf32>
    %21 = arith.mulf %20, %19 : vector<8x1xf32>
    %22 = math.exp %21 : vector<8x1xf32>
    %cst_7 = arith.constant 1.000000e+00 : f32
    %23 = vector.broadcast %cst_7 : f32 to vector<8x1xf32>
    %24 = arith.subf %23, %22 : vector<8x1xf32>
    %cst_8 = arith.constant 0.699999988 : f32
    %25 = vector.broadcast %cst_8 : f32 to vector<8x1xf32>
    %26 = arith.divf %24, %25 : vector<8x1xf32>
    %c8_i32 = arith.constant 8 : i32
    %27 = arith.muli %arg0, %c8_i32 : i32
    %28 = tpu.iota {dimensions = array<i32: 0>} : vector<8x1xi32>
    %29 = vector.broadcast %27 : i32 to vector<8x1xi32>
    %30 = arith.addi %29, %28 : vector<8x1xi32>
    %c8_i32_9 = arith.constant 8 : i32
    %31 = vector.broadcast %c8_i32_9 : i32 to vector<8x1xi32>
    %32 = arith.cmpi slt, %30, %31 : vector<8x1xi32>
    %cst_10 = arith.constant 0.000000e+00 : f32
    %33 = vector.broadcast %cst_10 : f32 to vector<8x1xf32>
    %34 = arith.select %32, %26, %33 : vector<8x1xi1>, vector<8x1xf32>
    %35 = vector.shape_cast %34 : vector<8x1xf32> to vector<1x8x1xf32>
    %cst_11 = arith.constant dense<0.000000e+00> : vector<1xf32>
    %36 = vector.multi_reduction <add>, %35, %cst_11 [1, 2] : vector<1x8x1xf32> to vector<1xf32>
    %37 = vector.shape_cast %36 : vector<1xf32> to vector<1x1x1xf32>
    %38 = vector.extract %37[0, 0, 0] : f32 from vector<1x1x1xf32>
    %c0_12 = arith.constant 0 : index
    %c0_13 = arith.constant 0 : index
    %39 = memref.load %arg3[%c0_12, %c0_13] : memref<1x1xf32, #tpu.memory_space<smem>>
    memref.store %38, %arg3[%c0_12, %c0_13] : memref<1x1xf32, #tpu.memory_space<smem>>
    return
  }
  func.func @transform_0(%arg0: i32) -> (i32, i32) {
    %c0_i32 = arith.constant 0 : i32
    %c0_i32_0 = arith.constant 0 : i32
    return %arg0, %c0_i32 : i32, i32
  }
  func.func @transform_1(%arg0: i32) -> (i32, i32) {
    %c0_i32 = arith.constant 0 : i32
    %c0_i32_0 = arith.constant 0 : i32
    return %arg0, %c0_i32 : i32, i32
  }
  func.func @transform_2(%arg0: i32) -> (i32, i32) {
    %c0_i32 = arith.constant 0 : i32
    %c0_i32_0 = arith.constant 0 : i32
    return %arg0, %c0_i32 : i32, i32
  }
}

</mosaic_0001>

<llo_original>
// kernel: tpu_custom_call.1
$region0: #{tpu_custom_call.1}
  #allocation0 [shape = 'u32[]', space=smem, size = 0x4, offset = 0x4, fixed_abs, tag = 'smem constant byte address 0x4 - core index']
  #allocation1 [shape = 'u32[144,128]{1,0:T(1,128)}', space=vmem, size = 0x12000, scoped, tag = 'internal scratch']
  %s0 = inlined_call_operand.vmem [shape: f32[8,16], index: 0, kind: input, shape index: {}]
  %s1 = inlined_call_operand.vmem [shape: s32[8,1], index: 1, kind: input, shape index: {}]
  %s2 = inlined_call_operand.hbm [shape: f32[1,1], index: 2, kind: output, shape index: {}]
  %s3 = sld [smem:[#allocation0]]
  $region18: #{tpu_custom_call.1} parent=0
    _
  %s5 = ssub.s32 1, %s3
  %s6 = scalar_select 0, %s5, %s3
  $region1: #{tpu_custom_call.1} parent=0
    #allocation2 [shape = 'u8[512]{0}', space=smem, size = 0x200, scoped, tag = 'output window, operand 0, single buffered']
    #allocation3 [shape = 's32[1]{0}', space=sflag, size = 0x4, scoped, tag = 'scoped memory for tpu_custom_call.1']
    %7 = vsyncpa [#allocation3], 0
    // Predicated region
    $region2: #{tpu_custom_call.1} parent=1 // pred_check
      _
    $region3: #{tpu_custom_call.1} parent=1 // pred_check_branch
      %9 = sbr.rel (0) target = $region5
    $region4: #{tpu_custom_call.1} parent=1 // pred_region
      _
    $region5: #{tpu_custom_call.1} parent=1 // pred_fallthru
      _
    // Predicated region
    $region6: #{tpu_custom_call.1} parent=1 // pred_check
      _
    $region7: #{tpu_custom_call.1} parent=1 // pred_check_branch
      %11 = sbr.rel (0) target = $region9
    $region8: #{tpu_custom_call.1} parent=1 // pred_region
      _
    $region9: #{tpu_custom_call.1} parent=1 // pred_fallthru
      _
    %v12 = vld [vmem:[%s0] sm:$0xff]
    %v13 = vld [vmem:[%s1] sm:$0xff]
    %vm14 = vcmask 130048
    %v15 = vsel %vm14, %v12, -inf
    %16 = vmax.xlane.f32.xlu0 %v15
    %v17 = vpop.xlane.xlu0 %16
    %v18 = vsub.f32 %v12, %v17
    %v19 = vmul.f32 %v18, 1.442695
    %v20 = vpow.pop %v19
    %v21 = vsel %vm14, %v20, 0.0
    %22 = vadd.xlane.f32.xlu0 %v21
    %v23 = vpop.xlane.xlu0 %22
    %v24 = vlog2.pop %v23
    %v25 = vmul.f32 %v24, 0.6931472
    %v26 = vadd.f32 %v17, %v25
    %v27 = vlaneseq
    %v28 = vand.u32 %v27, 127
    %29 = vset.pattern.permute.xlu0 0
    %30 = vperm.xlu0 %29, %v13
    %v31 = vpop.permute.xlu0 %30
    %vm32 = vcmp.eq.s32.totalorder %v28, %v31
    %v33 = vsel %vm32, %v12, 0.0
    %v34 = vsel %vm14, %v33, 0.0
    %35 = vadd.xlane.f32.xlu0 %v34
    %v36 = vpop.xlane.xlu0 %35
    %v37 = vsub.f32 %v36, %v26
    %v38 = vmul.f32 %v37, 0.7
    %v39 = vmul.f32 %v38, 1.442695
    %v40 = vpow.pop %v39
    %v41 = vsub.f32 1.0, %v40
    %v42 = vrcp.pop 0.7
    %v43 = vmul.f32 %v41, %v42
    %s44 = smul.u32 0, 8
    %v45 = vlaneseq
    %v46 = vshrl.u32 %v45, 7
    %v47 = vstv %s44
    %v48 = vadd.s32 %v47, %v46
    %vm49 = vcmp.lt.s32.totalorder %v48, 8
    %v50 = vsel %vm49, %v43, 0.0
    %vm51 = vcmask 7168
    %v52 = vsel %vm51, %v50, 0.0
    %53 = vadd.xlane.f32.xlu0 %v52
    %v54 = vpop.xlane.xlu0 %53
    %v55 = vrot.slane %v54, 4
    %v56 = vadd.f32 %v54, %v55
    %v57 = vrot.slane %v56, 2
    %v58 = vadd.f32 %v56, %v57
    %v59 = vrot.slane %v58, 1
    %v60 = vadd.f32 %v58, %v59
    %s61 = vtos %v60
    %s62 = scalar_lea.smem [#allocation2], 0
    %63 = sst [smem:[%s62]] %s61
    // Predicated region
    $region10: #{tpu_custom_call.1} parent=1 // pred_check
      _
    $region11: #{tpu_custom_call.1} parent=1 // pred_check_branch
      %65 = sbr.rel (0) target = $region13
    $region12: #{tpu_custom_call.1} parent=1 // pred_region
      %s67 = ssub.s32 16, 16
      %68 = vsyncadd [#allocation3], %s67
      %71 = dma.smem_to_hbm [#allocation2], 16, %s2, [#allocation3]
    $region13: #{tpu_custom_call.1} parent=1 // pred_fallthru
      _
    // Predicated region
    $region14: #{tpu_custom_call.1} parent=1 // pred_check
      _
    $region15: #{tpu_custom_call.1} parent=1 // pred_check_branch
      %73 = sbr.rel (0) target = $region17
    $region16: #{tpu_custom_call.1} parent=1 // pred_region
      %74 = dma.done [#allocation3], 16
    $region17: #{tpu_custom_call.1} parent=1 // pred_fallthru
      _
    %75 = sfence
    %76 = vsyncpa [#allocation3], 1

</llo_original>
